<compile_context>
chip_gen: v7x
topology: tpu7x:2x2x1
jax: 0.10.0
libtpu: 0.0.40
codegen_flags: <defaults>
</compile_context>

<pallas_src>
import jax
import jax.numpy as jnp
from jax.experimental import pallas as pl
from jax.experimental.pallas import tpu as pltpu


def _round_up(x, m):
    return (x + m - 1) // m * m


def _lora_linear_kernel(x_ref, wt_ref, bias_ref, ax_ref, bt_ref, o_ref, acc_ref):
    """One (i, j, k) grid step of y = x @ W^T + b + (scaling * x @ A^T) @ B^T.

    x_ref:    (TM, TK)  activation tile (compute dtype)
    wt_ref:   (TK, TN)  base weight, pre-transposed to (Din, Dout)
    bias_ref: (1,  TN)  bias (f32)
    ax_ref:   (TM, r)   precomputed scaling * (x @ A^T) tile (compute dtype)
    bt_ref:   (r,  TN)  lora_B pre-transposed to (r, Dout)
    o_ref:    (TM, TN)  output tile
    acc_ref:  (TM, TN)  f32 scratch accumulator for the base GEMM
    """
    k = pl.program_id(2)

    @pl.when(k == 0)
    def _init():
        # Seed the accumulator with the bias (saves one (TM, TN) f32 add in finalize).
        acc_ref[...] = jnp.broadcast_to(bias_ref[...], acc_ref.shape)

    # Base GEMM: contracts lhs last dim vs rhs first dim (MXU native), f32 accumulation.
    acc_ref[...] += jnp.dot(x_ref[...], wt_ref[...],
                            preferred_element_type=jnp.float32)

    @pl.when(k == pl.num_programs(2) - 1)
    def _finalize():
        # LoRA-B matmul once per output tile on the narrow pre-scaled intermediate.
        lora = jnp.dot(ax_ref[...], bt_ref[...],
                       preferred_element_type=jnp.float32)
        o_ref[...] = (acc_ref[...] + lora).astype(o_ref.dtype)


def prepare_lora_weights(w_base, b_base, lora_A, lora_B, *,
                         tile_n=512, tile_k=1024,
                         compute_dtype=jnp.bfloat16):
    """One-time weight preparation (do this at parameter load, OUTSIDE the per-call path).

    Pre-transposes, casts and zero-pads the weight-side operands so the per-forward
    wrapper never touches them again:
        w_base: (Dout, Din) -> W^T (Din_pad, Dout_pad)
        lora_A: (r, Din)    -> A^T (Din_pad, r)
        lora_B: (Dout, r)   -> B^T (r, Dout_pad)
        b_base: (Dout,)     -> (1, Dout_pad) f32
    """
    dout, din = w_base.shape
    r = lora_A.shape[0]
    assert lora_A.shape == (r, din)
    assert lora_B.shape == (dout, r)

    tn = min(tile_n, _round_up(dout, 128))
    tk = min(tile_k, _round_up(din, 128))
    n_pad = _round_up(dout, tn)
    k_pad = _round_up(din, tk)

    w_t = jnp.transpose(w_base).astype(compute_dtype)      # (Din, Dout)
    a_t = jnp.transpose(lora_A).astype(compute_dtype)      # (Din, r)
    b_t = jnp.transpose(lora_B).astype(compute_dtype)      # (r, Dout)
    bias = b_base.reshape(1, dout).astype(jnp.float32)     # f32 bias

    if k_pad != din or n_pad != dout:
        w_t = jnp.pad(w_t, ((0, k_pad - din), (0, n_pad - dout)))
        a_t = jnp.pad(a_t, ((0, k_pad - din), (0, 0)))
        b_t = jnp.pad(b_t, ((0, 0), (0, n_pad - dout)))
        bias = jnp.pad(bias, ((0, 0), (0, n_pad - dout)))

    return dict(w_t=w_t, a_t=a_t, b_t=b_t, bias=bias,
                din=din, dout=dout, r=r, tn=tn, tk=tk,
                n_pad=n_pad, k_pad=k_pad, compute_dtype=compute_dtype)


def distributed_lora_linear(x, prepared, *, lora_alpha, tile_m=1024):
    """Fused base-Linear + LoRA forward (DistributedLoRALayer, rank-sharded,
    world_size=1) as a Pallas TPU kernel.

    x:        (batch, seq, Din)
    prepared: output of prepare_lora_weights (weights already transposed/cast/padded)
    returns   (batch, seq, Dout) in x.dtype.
    """
    batch, seq, din = x.shape
    assert din == prepared["din"]
    dout = prepared["dout"]
    r = prepared["r"]
    tn, tk = prepared["tn"], prepared["tk"]
    n_pad, k_pad = prepared["n_pad"], prepared["k_pad"]
    compute_dtype = prepared["compute_dtype"]
    out_dtype = x.dtype

    scaling = float(lora_alpha) / float(r)

    m = batch * seq
    tm = min(tile_m, _round_up(m, 16))     # 16 covers f32 (8) and bf16 (16) sublane packing
    m_pad = _round_up(m, tm)

    # Per-call activation prep only (weights were prepared once, above).
    x2d = x.reshape(m, din).astype(compute_dtype)
    if m_pad != m or k_pad != din:
        x2d = jnp.pad(x2d, ((0, m_pad - m), (0, k_pad - din)))

    # LoRA-A path hoisted out of the kernel: tiny skinny GEMM (m_pad, r), f32 accumulate,
    # scale the narrow intermediate, then cast to compute dtype (no-op for f32 path).
    ax = jnp.dot(x2d, prepared["a_t"], preferred_element_type=jnp.float32)
    ax = (ax * scaling).astype(compute_dtype)              # (m_pad, r)

    grid = (m_pad // tm, n_pad // tn, k_pad // tk)

    # VMEM budget (double-buffered inputs/outputs + f32 accumulator scratch).
    cb = jnp.dtype(compute_dtype).itemsize
    ob = jnp.dtype(out_dtype).itemsize
    est = (2 * tm * tk * cb          # x tiles
           + 2 * tk * tn * cb        # W^T tiles
           + 2 * 1 * tn * 4          # bias
           + 2 * tm * r * cb         # ax
           + 2 * r * tn * cb         # B^T
           + 2 * tm * tn * ob        # output tiles
           + tm * tn * 4)            # f32 accumulator scratch
    vmem_limit = int(min(max(2 * est, 32 << 20), 60 << 20))   # stays inside v7x's 64 MiB

    out2d = pl.pallas_call(
        _lora_linear_kernel,
        out_shape=jax.ShapeDtypeStruct((m_pad, n_pad), out_dtype),
        grid_spec=pltpu.PrefetchScalarGridSpec(
            num_scalar_prefetch=0,
            grid=grid,
            in_specs=[
                pl.BlockSpec((tm, tk), lambda i, j, k: (i, k)),   # x tile
                pl.BlockSpec((tk, tn), lambda i, j, k: (k, j)),   # W^T tile
                pl.BlockSpec((1, tn), lambda i, j, k: (0, j)),    # bias (N only)
                pl.BlockSpec((tm, r), lambda i, j, k: (i, 0)),    # scaled x@A^T (M only)
                pl.BlockSpec((r, tn), lambda i, j, k: (0, j)),    # B^T (N only)
            ],
            out_specs=pl.BlockSpec((tm, tn), lambda i, j, k: (i, j)),
            scratch_shapes=[
                pltpu.VMEM((tm, tn), jnp.float32),   # base-GEMM accumulator
            ],
        ),
        compiler_params=pltpu.CompilerParams(
            dimension_semantics=("parallel", "parallel", "arbitrary"),
            vmem_limit_bytes=vmem_limit),
    )(x2d, prepared["w_t"], prepared["bias"], ax, prepared["b_t"])

    return out2d[:m, :dout].reshape(batch, seq, dout)


if __name__ == "__main__":
    # Small shapes consistent with the module: a target Linear (e.g. q_proj)
    # wrapped by DistributedLoRALayer with r=16, lora_alpha=32.
    batch, seq = 2, 8
    din, dout = 32, 32
    r, lora_alpha = 16, 32

    key = jax.random.PRNGKey(0)
    kx, kw, kb, ka, kbb = jax.random.split(key, 5)

    x = jax.random.normal(kx, (batch, seq, din), dtype=jnp.float32)
    w_base = jax.random.normal(kw, (dout, din), dtype=jnp.float32) * 0.05
    b_base = jax.random.normal(kb, (dout,), dtype=jnp.float32) * 0.05
    # PyTorch init makes lora_B zeros; use small random values so the LoRA path is exercised.
    lora_A = jax.random.normal(ka, (r, din), dtype=jnp.float32) * 0.05
    lora_B = jax.random.normal(kbb, (dout, r), dtype=jnp.float32) * 0.05

    # Pure-JAX reference.
    scaling = lora_alpha / r
    ref = (jnp.einsum("bsi,oi->bso", x, w_base) + b_base
           + scaling * jnp.einsum("bsr,or->bso",
                                  jnp.einsum("bsi,ri->bsr", x, lora_A), lora_B))

    # 1) f32-operand path (tight tolerance).
    prep_f32 = prepare_lora_weights(w_base, b_base, lora_A, lora_B,
                                    compute_dtype=jnp.float32)
    out_f32 = distributed_lora_linear(x, prep_f32, lora_alpha=lora_alpha)
    out_f32 = jax.block_until_ready(out_f32)
    assert out_f32.shape == (batch, seq, dout)
    assert jnp.allclose(out_f32, ref, atol=1e-3, rtol=1e-3)

    # 2) bf16 operands with f32 accumulation (default production path; looser tolerance
    #    since operands are rounded to bf16 before hitting the MXU).
    prep_bf16 = prepare_lora_weights(w_base, b_base, lora_A, lora_B)  # bf16 default
    out_bf16 = distributed_lora_linear(x, prep_bf16, lora_alpha=lora_alpha)
    out_bf16 = jax.block_until_ready(out_bf16)
    assert jnp.allclose(out_bf16.astype(jnp.float32), ref, atol=2e-2, rtol=2e-2)

    # TODO(synk): multi-rank dist.send/recv/all_reduce paths of DistributedLoRALayer
    # (parameter / rank sharding across ranks) and dropout RNG (lora_dropout>0) are not
    # modeled on a single device.
    print("KERNEL_OK")
</pallas_src>

<mosaic_0001>
module attributes {stable_mosaic.version = 11 : i64} {
  func.func @_lora_linear_kernel(%arg0: i32, %arg1: i32, %arg2: i32, %arg3: memref<16x128xf32, #tpu.memory_space<vmem>>, %arg4: memref<128x128xf32, #tpu.memory_space<vmem>>, %arg5: memref<1x128xf32, #tpu.memory_space<vmem>>, %arg6: memref<16x16xf32, #tpu.memory_space<vmem>>, %arg7: memref<16x128xf32, #tpu.memory_space<vmem>>, %arg8: memref<16x128xf32, #tpu.memory_space<vmem>>, %arg9: memref<16x128xf32, #tpu.memory_space<vmem>>) attributes {dimension_semantics = [#tpu.dimension_semantics<parallel>, #tpu.dimension_semantics<parallel>, #tpu.dimension_semantics<arbitrary>], iteration_bounds = array<i64: 1, 1, 1>, scalar_prefetch = 0 : i64, scratch_operands = 1 : i64, tpu.core_type = #tpu.core_type<tc>, window_params = [{transform_indices = @transform_0, window_bounds = array<i64: 16, 128>}, {transform_indices = @transform_1, window_bounds = array<i64: 128, 128>}, {transform_indices = @transform_2, window_bounds = array<i64: 1, 128>}, {transform_indices = @transform_3, window_bounds = array<i64: 16, 16>}, {transform_indices = @transform_4, window_bounds = array<i64: 16, 128>}, {transform_indices = @transform_5, window_bounds = array<i64: 16, 128>}]} {
    %c0_i32 = arith.constant 0 : i32
    %0 = arith.cmpi eq, %arg2, %c0_i32 : i32
    %1 = arith.extui %0 : i1 to i32
    %c0_i32_0 = arith.constant 0 : i32
    %2 = arith.cmpi ne, %1, %c0_i32_0 : i32
    scf.if %2 {
      %c0_10 = arith.constant 0 : index
      %c0_11 = arith.constant 0 : index
      %12 = vector.load %arg5[%c0_10, %c0_11] : memref<1x128xf32, #tpu.memory_space<vmem>>, vector<1x128xf32>
      %13 = vector.shape_cast %12 : vector<1x128xf32> to vector<1x128xf32>
      %14 = vector.broadcast %13 : vector<1x128xf32> to vector<16x128xf32>
      %c0_12 = arith.constant 0 : index
      %c0_13 = arith.constant 0 : index
      %15 = vector.load %arg9[%c0_12, %c0_13] : memref<16x128xf32, #tpu.memory_space<vmem>>, vector<16x128xf32>
      tpu.vector_store %arg9[%c0_12, %c0_13], %14 {strides = array<i32>} : memref<16x128xf32, #tpu.memory_space<vmem>>, vector<16x128xf32>,
    } else {
    }
    %c0 = arith.constant 0 : index
    %c0_1 = arith.constant 0 : index
    %3 = vector.load %arg9[%c0, %c0_1] : memref<16x128xf32, #tpu.memory_space<vmem>>, vector<16x128xf32>
    %c0_2 = arith.constant 0 : index
    %c0_3 = arith.constant 0 : index
    %4 = vector.load %arg3[%c0_2, %c0_3] : memref<16x128xf32, #tpu.memory_space<vmem>>, vector<16x128xf32>
    %c0_4 = arith.constant 0 : index
    %c0_5 = arith.constant 0 : index
    %5 = vector.load %arg4[%c0_4, %c0_5] : memref<128x128xf32, #tpu.memory_space<vmem>>, vector<128x128xf32>
    %cst = arith.constant dense<0.000000e+00> : vector<16x128xf32>
    %6 = tpu.matmul %4, %5, %cst {dimension_numbers = #tpu.dot_dimension_numbers<[1], [0], [0], [1], [0, 0, 1, 1], [], []>} : vector<16x128xf32>, vector<128x128xf32>, vector<16x128xf32> -> vector<16x128xf32>
    %7 = arith.addf %3, %6 : vector<16x128xf32>
    %c0_6 = arith.constant 0 : index
    %c0_7 = arith.constant 0 : index
    %8 = vector.load %arg9[%c0_6, %c0_7] : memref<16x128xf32, #tpu.memory_space<vmem>>, vector<16x128xf32>
    tpu.vector_store %arg9[%c0_6, %c0_7], %7 {strides = array<i32>} : memref<16x128xf32, #tpu.memory_space<vmem>>, vector<16x128xf32>,
    %c0_i32_8 = arith.constant 0 : i32
    %9 = arith.cmpi eq, %arg2, %c0_i32_8 : i32
    %10 = arith.extui %9 : i1 to i32
    %c0_i32_9 = arith.constant 0 : i32
    %11 = arith.cmpi ne, %10, %c0_i32_9 : i32
    scf.if %11 {
      %c0_10 = arith.constant 0 : index
      %c0_11 = arith.constant 0 : index
      %12 = vector.load %arg6[%c0_10, %c0_11] : memref<16x16xf32, #tpu.memory_space<vmem>>, vector<16x16xf32>
      %c0_12 = arith.constant 0 : index
      %c0_13 = arith.constant 0 : index
      %13 = vector.load %arg7[%c0_12, %c0_13] : memref<16x128xf32, #tpu.memory_space<vmem>>, vector<16x128xf32>
      %cst_14 = arith.constant dense<0.000000e+00> : vector<16x128xf32>
      %14 = tpu.matmul %12, %13, %cst_14 {dimension_numbers = #tpu.dot_dimension_numbers<[1], [0], [0], [1], [0, 0, 1, 1], [], []>} : vector<16x16xf32>, vector<16x128xf32>, vector<16x128xf32> -> vector<16x128xf32>
      %c0_15 = arith.constant 0 : index
      %c0_16 = arith.constant 0 : index
      %15 = vector.load %arg9[%c0_15, %c0_16] : memref<16x128xf32, #tpu.memory_space<vmem>>, vector<16x128xf32>
      %16 = arith.addf %15, %14 : vector<16x128xf32>
      %c0_17 = arith.constant 0 : index
      %c0_18 = arith.constant 0 : index
      %17 = vector.load %arg8[%c0_17, %c0_18] : memref<16x128xf32, #tpu.memory_space<vmem>>, vector<16x128xf32>
      tpu.vector_store %arg8[%c0_17, %c0_18], %16 {strides = array<i32>} : memref<16x128xf32, #tpu.memory_space<vmem>>, vector<16x128xf32>,
    } else {
    }
    return
  }
  func.func @transform_0(%arg0: i32, %arg1: i32, %arg2: i32) -> (i32, i32) {
    %c0_i32 = arith.constant 0 : i32
    return %arg0, %arg2 : i32, i32
  }
  func.func @transform_1(%arg0: i32, %arg1: i32, %arg2: i32) -> (i32, i32) {
    %c0_i32 = arith.constant 0 : i32
    return %arg2, %arg1 : i32, i32
  }
  func.func @transform_2(%arg0: i32, %arg1: i32, %arg2: i32) -> (i32, i32) {
    %c0_i32 = arith.constant 0 : i32
    %c0_i32_0 = arith.constant 0 : i32
    return %c0_i32, %arg1 : i32, i32
  }
  func.func @transform_3(%arg0: i32, %arg1: i32, %arg2: i32) -> (i32, i32) {
    %c0_i32 = arith.constant 0 : i32
    %c0_i32_0 = arith.constant 0 : i32
    return %arg0, %c0_i32 : i32, i32
  }
  func.func @transform_4(%arg0: i32, %arg1: i32, %arg2: i32) -> (i32, i32) {
    %c0_i32 = arith.constant 0 : i32
    %c0_i32_0 = arith.constant 0 : i32
    return %c0_i32, %arg1 : i32, i32
  }
  func.func @transform_5(%arg0: i32, %arg1: i32, %arg2: i32) -> (i32, i32) {
    %c0_i32 = arith.constant 0 : i32
    return %arg0, %arg1 : i32, i32
  }
}

</mosaic_0001>

<llo_original>
// kernel: tpu_custom_call.1
$region0: #{tpu_custom_call.1}
  #allocation0 [shape = 'u32[]', space=smem, size = 0x4, offset = 0x4, fixed_abs, tag = 'smem constant byte address 0x4 - core index']
  #allocation1 [shape = 'u32[144,128]{1,0:T(1,128)}', space=vmem, size = 0x12000, scoped, tag = 'internal scratch']
  #allocation2 [shape = 'f32[16,128]{1,0:T(8,128)}', space=vmem, size = 0x2000, scoped, tag = 'scratch operand']
  %s0 = inlined_call_operand.hbm [shape: f32[16,128], index: 0, kind: input, shape index: {}]
  %s1 = inlined_call_operand.hbm [shape: f32[128,128], index: 1, kind: input, shape index: {}]
  %s2 = inlined_call_operand.vmem [shape: f32[1,128], index: 2, kind: input, shape index: {}]
  %s3 = inlined_call_operand.hbm [shape: f32[16,16], index: 3, kind: input, shape index: {}]
  %s4 = inlined_call_operand.hbm [shape: f32[16,128], index: 4, kind: input, shape index: {}]
  %s5 = inlined_call_operand.hbm [shape: f32[16,128], index: 5, kind: output, shape index: {}]
  %s6 = sld [smem:[#allocation0]]
  $region54: #{tpu_custom_call.1} parent=0
    _
  %s8 = ssub.s32 1, %s6
  %s9 = scalar_select 0, %s8, %s6
  $region1: #{tpu_custom_call.1} parent=0
    #allocation3 [shape = 'u8[8192]{0}', space=vmem, size = 0x2000, scoped, tag = 'input window, operand 0, single buffered']
    #allocation4 [shape = 's32[1]{0}', space=sflag, size = 0x4, scoped, tag = 'scoped memory for tpu_custom_call.1']
    #allocation5 [shape = 's32[1]{0}', space=sflag, size = 0x4, scoped, tag = 'scoped memory for tpu_custom_call.1']
    #allocation6 [shape = 'u8[65536]{0}', space=vmem, size = 0x10000, scoped, tag = 'input window, operand 1, single buffered']
    #allocation7 [shape = 's32[1]{0}', space=sflag, size = 0x4, scoped, tag = 'scoped memory for tpu_custom_call.1']
    #allocation8 [shape = 'u8[8192]{0}', space=vmem, size = 0x2000, scoped, tag = 'input window, operand 3, single buffered']
    #allocation9 [shape = 'u8[8192]{0}', space=vmem, size = 0x2000, scoped, tag = 'input window, operand 4, single buffered']
    #allocation10 [shape = 's32[1]{0}', space=sflag, size = 0x4, scoped, tag = 'scoped memory for tpu_custom_call.1']
    #allocation11 [shape = 'u8[8192]{0}', space=vmem, size = 0x2000, scoped, tag = 'output window, operand 0, single buffered']
    %10 = vsyncpa [#allocation4], 0
    %11 = vsyncpa [#allocation7], 0
    %12 = vsyncpa [#allocation10], 0
    %13 = vsyncpa [#allocation5], 0
    // Predicated region
    $region2: #{tpu_custom_call.1} parent=1 // pred_check
      _
    $region3: #{tpu_custom_call.1} parent=1 // pred_check_branch
      %15 = sbr.rel (0) target = $region5
    $region4: #{tpu_custom_call.1} parent=1 // pred_region
      %s17 = ssub.s32 256, 256
      %18 = vsyncadd [#allocation4], %s17
      %s19 = sshll.u32 [#allocation3], 4
      %s20 = int_to_ptr.vmem [resolvable:$true] %s19
      %25 = dma.hbm_to_vmem [thread:$0]  %s0, 256, %s20, [#allocation4], 128, 128, 8
    $region5: #{tpu_custom_call.1} parent=1 // pred_fallthru
      _
    // Predicated region
    $region6: #{tpu_custom_call.1} parent=1 // pred_check
      _
    $region7: #{tpu_custom_call.1} parent=1 // pred_check_branch
      %27 = sbr.rel (0) target = $region9
    $region8: #{tpu_custom_call.1} parent=1 // pred_region
      %s29 = ssub.s32 2048, 2048
      %30 = vsyncadd [#allocation7], %s29
      %s31 = sshll.u32 [#allocation6], 4
      %s32 = int_to_ptr.vmem [resolvable:$true] %s31
      %37 = dma.hbm_to_vmem [thread:$0]  %s1, 2048, %s32, [#allocation7], 128, 128, 8
    $region9: #{tpu_custom_call.1} parent=1 // pred_fallthru
      _
    // Predicated region
    $region10: #{tpu_custom_call.1} parent=1 // pred_check
      _
    $region11: #{tpu_custom_call.1} parent=1 // pred_check_branch
      %39 = sbr.rel (0) target = $region13
    $region12: #{tpu_custom_call.1} parent=1 // pred_region
      _
    $region13: #{tpu_custom_call.1} parent=1 // pred_fallthru
      _
    // Predicated region
    $region14: #{tpu_custom_call.1} parent=1 // pred_check
      _
    $region15: #{tpu_custom_call.1} parent=1 // pred_check_branch
      %41 = sbr.rel (0) target = $region17
    $region16: #{tpu_custom_call.1} parent=1 // pred_region
      %s43 = ssub.s32 256, 256
      %44 = vsyncadd [#allocation7], %s43
      %s45 = sshll.u32 [#allocation8], 4
      %s46 = int_to_ptr.vmem [resolvable:$true] %s45
      %51 = dma.hbm_to_vmem [thread:$0]  %s3, 256, %s46, [#allocation7], 128, 128, 8
    $region17: #{tpu_custom_call.1} parent=1 // pred_fallthru
      _
    // Predicated region
    $region18: #{tpu_custom_call.1} parent=1 // pred_check
      _
    $region19: #{tpu_custom_call.1} parent=1 // pred_check_branch
      %53 = sbr.rel (0) target = $region21
    $region20: #{tpu_custom_call.1} parent=1 // pred_region
      %s55 = ssub.s32 256, 256
      %56 = vsyncadd [#allocation10], %s55
      %s57 = sshll.u32 [#allocation9], 4
      %s58 = int_to_ptr.vmem [resolvable:$true] %s57
      %63 = dma.hbm_to_vmem [thread:$0]  %s4, 256, %s58, [#allocation10], 128, 128, 8
    $region21: #{tpu_custom_call.1} parent=1 // pred_fallthru
      _
    // Predicated region
    $region22: #{tpu_custom_call.1} parent=1 // pred_check
      _
    $region23: #{tpu_custom_call.1} parent=1 // pred_check_branch
      %65 = sbr.rel (0) target = $region25
    $region24: #{tpu_custom_call.1} parent=1 // pred_region
      %66 = dma.done [#allocation4], 256
    $region25: #{tpu_custom_call.1} parent=1 // pred_fallthru
      _
    // Predicated region
    $region26: #{tpu_custom_call.1} parent=1 // pred_check
      _
    $region27: #{tpu_custom_call.1} parent=1 // pred_check_branch
      %68 = sbr.rel (0) target = $region29
    $region28: #{tpu_custom_call.1} parent=1 // pred_region
      %69 = dma.done [#allocation7], 2048
    $region29: #{tpu_custom_call.1} parent=1 // pred_fallthru
      _
    // Predicated region
    $region30: #{tpu_custom_call.1} parent=1 // pred_check
      _
    $region31: #{tpu_custom_call.1} parent=1 // pred_check_branch
      %71 = sbr.rel (0) target = $region33
    $region32: #{tpu_custom_call.1} parent=1 // pred_region
      %72 = dma.done [#allocation7], 256
    $region33: #{tpu_custom_call.1} parent=1 // pred_fallthru
      _
    // Predicated region
    $region34: #{tpu_custom_call.1} parent=1 // pred_check
      _
    $region35: #{tpu_custom_call.1} parent=1 // pred_check_branch
      %74 = sbr.rel (0) target = $region37
    $region36: #{tpu_custom_call.1} parent=1 // pred_region
      %75 = dma.done [#allocation10], 256
    $region37: #{tpu_custom_call.1} parent=1 // pred_fallthru
      _
    %p76 = scmp.eq.s32.totalorder 0, 0
    // Predicated region
    $region38: #{tpu_custom_call.1} parent=1 // pred_check
      %p77 = pneg %p76
    $region39: #{tpu_custom_call.1} parent=1 // pred_check_branch
      %79 = sbr.rel (%p77) target = $region41
    $region40: #{tpu_custom_call.1} parent=1 // pred_region
      %v80 = vld [vmem:[%s2] sm:$0x1]
      %v82 = vlaneseq
      %v83 = vshrl.u32 %v82, 7
      %v84 = vsub.s32 0, %v83
      %v85 = vrot.slane %v80, %v84
      %87 = vst [vmem:[#allocation2] sm:$0xff] %v85
      %88 = vst [vmem:[#allocation2 + $0x8] sm:$0xff] %v85
    $region41: #{tpu_custom_call.1} parent=1 // pred_fallthru
      _
    %v89 = vld [vmem:[#allocation2] sm:$0xff]
    %v90 = vld [vmem:[#allocation2 + $0x8] sm:$0xff]
    %v91 = vld [vmem:[#allocation3] sm:$0xff]
    %v92 = vld [vmem:[#allocation3 + $0x8] sm:$0xff]
    %v93 = vld [vmem:[#allocation6] sm:$0xff]
    %v94 = vld [vmem:[#allocation6 + $0x8] sm:$0xff]
    %v95 = vld [vmem:[#allocation6 + $0x10] sm:$0xff]
    %v96 = vld [vmem:[#allocation6 + $0x18] sm:$0xff]
    %v97 = vld [vmem:[#allocation6 + $0x20] sm:$0xff]
    %v98 = vld [vmem:[#allocation6 + $0x28] sm:$0xff]
    %v99 = vld [vmem:[#allocation6 + $0x30] sm:$0xff]
    %v100 = vld [vmem:[#allocation6 + $0x38] sm:$0xff]
    %v101 = vld [vmem:[#allocation6 + $0x40] sm:$0xff]
    %v102 = vld [vmem:[#allocation6 + $0x48] sm:$0xff]
    %v103 = vld [vmem:[#allocation6 + $0x50] sm:$0xff]
    %v104 = vld [vmem:[#allocation6 + $0x58] sm:$0xff]
    %v105 = vld [vmem:[#allocation6 + $0x60] sm:$0xff]
    %v106 = vld [vmem:[#allocation6 + $0x68] sm:$0xff]
    %v107 = vld [vmem:[#allocation6 + $0x70] sm:$0xff]
    %v108 = vld [vmem:[#allocation6 + $0x78] sm:$0xff]
    %109 = vmatprep.subr.mxu0 0.0
    %110 = vmatpush1.msra.mxu0 %v93
    %111 = vmatprep.subr.mxu0 0.0
    %112 = vmatpush1.msra.mxu0 %v94
    %113 = vmatprep.subr.mxu0 0.0
    %114 = vmatpush1.msra.mxu0 %v95
    %115 = vmatprep.subr.mxu0 0.0
    %116 = vmatpush1.msra.mxu0 %v96
    %117 = vmatprep.subr.mxu0 0.0
    %118 = vmatpush1.msra.mxu0 %v97
    %119 = vmatprep.subr.mxu0 0.0
    %120 = vmatpush1.msra.mxu0 %v98
    %121 = vmatprep.subr.mxu0 0.0
    %122 = vmatpush1.msra.mxu0 %v99
    %123 = vmatprep.subr.mxu0 0.0
    %124 = vmatpush1.msra.mxu0 %v100
    %125 = vmatprep.subr.mxu0 0.0
    %126 = vmatpush1.msra.mxu0 %v101
    %127 = vmatprep.subr.mxu0 0.0
    %128 = vmatpush1.msra.mxu0 %v102
    %129 = vmatprep.subr.mxu0 0.0
    %130 = vmatpush1.msra.mxu0 %v103
    %131 = vmatprep.subr.mxu0 0.0
    %132 = vmatpush1.msra.mxu0 %v104
    %133 = vmatprep.subr.mxu0 0.0
    %134 = vmatpush1.msra.mxu0 %v105
    %135 = vmatprep.subr.mxu0 0.0
    %136 = vmatpush1.msra.mxu0 %v106
    %137 = vmatprep.subr.mxu0 0.0
    %138 = vmatpush1.msra.mxu0 %v107
    %139 = vmatprep.subr.mxu0 0.0
    %140 = vmatpush1.msra.mxu0 %v108
    %141 = vmatprep.subr.mxu0 0.0
    %142 = vmatpush1.msra.mxu0 0.0
    %143 = vmatprep.subr.mxu0 0.0
    %144 = vmatpush1.msra.mxu0 0.0
    %145 = vmatprep.subr.mxu0 0.0
    %146 = vmatpush1.msra.mxu0 0.0
    %147 = vmatprep.subr.mxu0 0.0
    %148 = vmatpush1.msra.mxu0 0.0
    %149 = vmatprep.subr.mxu0 0.0
    %150 = vmatpush1.msra.mxu0 0.0
    %151 = vmatprep.subr.mxu0 0.0
    %152 = vmatpush1.msra.mxu0 0.0
    %153 = vmatprep.subr.mxu0 0.0
    %154 = vmatpush1.msra.mxu0 0.0
    %155 = vmatprep.subr.mxu0 0.0
    %156 = vmatpush1.msra.mxu0 0.0
    %157 = vmatprep.subr.mxu0 0.0
    %158 = vmatpush1.msra.mxu0 0.0
    %159 = vmatprep.subr.mxu0 0.0
    %160 = vmatpush1.msra.mxu0 0.0
    %161 = vmatprep.subr.mxu0 0.0
    %162 = vmatpush1.msra.mxu0 0.0
    %163 = vmatprep.subr.mxu0 0.0
    %164 = vmatpush1.msra.mxu0 0.0
    %165 = vmatprep.subr.mxu0 0.0
    %166 = vmatpush1.msra.mxu0 0.0
    %167 = vmatprep.subr.mxu0 0.0
    %168 = vmatpush1.msra.mxu0 0.0
    %169 = vmatprep.subr.mxu0 0.0
    %170 = vmatpush1.msra.mxu0 0.0
    %171 = vmatprep.subr.mxu0 0.0
    %172 = vmatpush1.msra.mxu0 0.0
    %173 = vmatprep.mubr.f32.mxu0 0.0
    %174 = vmatmul.mubr.f32.gmra.mrb[0].mxu0 %v91
    %v175 = vpop.f32.mrb[0].mxu0
    %v176 = vadd.f32 0.0, %v175
    %v177 = vpop.f32.mrb[0].mxu0
    %178 = vmatprep.mubr.f32.mxu0 0.0
    %179 = vmatmul.mubr.f32.gmra.mrb[0].mxu0 %v92
    %v180 = vpop.f32.mrb[0].mxu0
    %v181 = vadd.f32 0.0, %v180
    %v182 = vpop.f32.mrb[0].mxu0
    %183 = vdwg.mxu0
    %v184 = vadd.f32 %v89, %v176
    %v185 = vadd.f32 %v90, %v181
    %186 = vst [vmem:[#allocation2] sm:$0xff] %v184
    %187 = vst [vmem:[#allocation2 + $0x8] sm:$0xff] %v185
    // Predicated region
    $region42: #{tpu_custom_call.1} parent=1 // pred_check
      %p188 = pneg %p76
    $region43: #{tpu_custom_call.1} parent=1 // pred_check_branch
      %190 = sbr.rel (%p188) target = $region45
    $region44: #{tpu_custom_call.1} parent=1 // pred_region
      %v191 = vld [vmem:[#allocation8] sm:$0xff]
      %v192 = vld [vmem:[#allocation8 + $0x8] sm:$0xff]
      %v193 = vld [vmem:[#allocation9] sm:$0xff]
      %v194 = vld [vmem:[#allocation9 + $0x8] sm:$0xff]
      %vm195 = vcmask 130048
      %v197 = vsel %vm195, %v191, 0
      %v200 = vsel %vm195, %v192, 0
      %202 = vmatprep.subr.mxu0 0.0
      %203 = vmatpush1.msra.mxu0 %v193
      %204 = vmatprep.subr.mxu0 0.0
      %205 = vmatpush1.msra.mxu0 %v194
      %206 = vmatprep.subr.mxu0 0.0
      %207 = vmatpush1.msra.mxu0 0.0
      %208 = vmatprep.subr.mxu0 0.0
      %209 = vmatpush1.msra.mxu0 0.0
      %210 = vmatprep.subr.mxu0 0.0
      %211 = vmatpush1.msra.mxu0 0.0
      %212 = vmatprep.subr.mxu0 0.0
      %213 = vmatpush1.msra.mxu0 0.0
      %214 = vmatprep.subr.mxu0 0.0
      %215 = vmatpush1.msra.mxu0 0.0
      %216 = vmatprep.subr.mxu0 0.0
      %217 = vmatpush1.msra.mxu0 0.0
      %218 = vmatprep.subr.mxu0 0.0
      %219 = vmatpush1.msra.mxu0 0.0
      %220 = vmatprep.subr.mxu0 0.0
      %221 = vmatpush1.msra.mxu0 0.0
      %222 = vmatprep.subr.mxu0 0.0
      %223 = vmatpush1.msra.mxu0 0.0
      %224 = vmatprep.subr.mxu0 0.0
      %225 = vmatpush1.msra.mxu0 0.0
      %226 = vmatprep.subr.mxu0 0.0
      %227 = vmatpush1.msra.mxu0 0.0
      %228 = vmatprep.subr.mxu0 0.0
      %229 = vmatpush1.msra.mxu0 0.0
      %230 = vmatprep.subr.mxu0 0.0
      %231 = vmatpush1.msra.mxu0 0.0
      %232 = vmatprep.subr.mxu0 0.0
      %233 = vmatpush1.msra.mxu0 0.0
      %234 = vmatprep.subr.mxu0 0.0
      %235 = vmatpush1.msra.mxu0 0.0
      %236 = vmatprep.subr.mxu0 0.0
      %237 = vmatpush1.msra.mxu0 0.0
      %238 = vmatprep.subr.mxu0 0.0
      %239 = vmatpush1.msra.mxu0 0.0
      %240 = vmatprep.subr.mxu0 0.0
      %241 = vmatpush1.msra.mxu0 0.0
      %242 = vmatprep.subr.mxu0 0.0
      %243 = vmatpush1.msra.mxu0 0.0
      %244 = vmatprep.subr.mxu0 0.0
      %245 = vmatpush1.msra.mxu0 0.0
      %246 = vmatprep.subr.mxu0 0.0
      %247 = vmatpush1.msra.mxu0 0.0
      %248 = vmatprep.subr.mxu0 0.0
      %249 = vmatpush1.msra.mxu0 0.0
      %250 = vmatprep.subr.mxu0 0.0
      %251 = vmatpush1.msra.mxu0 0.0
      %252 = vmatprep.subr.mxu0 0.0
      %253 = vmatpush1.msra.mxu0 0.0
      %254 = vmatprep.subr.mxu0 0.0
      %255 = vmatpush1.msra.mxu0 0.0
      %256 = vmatprep.subr.mxu0 0.0
      %257 = vmatpush1.msra.mxu0 0.0
      %258 = vmatprep.subr.mxu0 0.0
      %259 = vmatpush1.msra.mxu0 0.0
      %260 = vmatprep.subr.mxu0 0.0
      %261 = vmatpush1.msra.mxu0 0.0
      %262 = vmatprep.subr.mxu0 0.0
      %263 = vmatpush1.msra.mxu0 0.0
      %264 = vmatprep.subr.mxu0 0.0
      %265 = vmatpush1.msra.mxu0 0.0
      %266 = vmatprep.mubr.f32.mxu0 0.0
      %267 = vmatmul.mubr.f32.gmra.mrb[0].mxu0 %v197
      %v268 = vpop.f32.mrb[0].mxu0
      %v269 = vadd.f32 0.0, %v268
      %v270 = vpop.f32.mrb[0].mxu0
      %271 = vmatprep.mubr.f32.mxu0 0.0
      %272 = vmatmul.mubr.f32.gmra.mrb[0].mxu0 %v200
      %v273 = vpop.f32.mrb[0].mxu0
      %v274 = vadd.f32 0.0, %v273
      %v275 = vpop.f32.mrb[0].mxu0
      %276 = vdwg.mxu0
      %v277 = vld [vmem:[#allocation2] sm:$0xff]
      %v278 = vld [vmem:[#allocation2 + $0x8] sm:$0xff]
      %v279 = vadd.f32 %v277, %v269
      %v280 = vadd.f32 %v278, %v274
      %281 = vst [vmem:[#allocation11] sm:$0xff] %v279
      %282 = vst [vmem:[#allocation11 + $0x8] sm:$0xff] %v280
    $region45: #{tpu_custom_call.1} parent=1 // pred_fallthru
      _
    // Predicated region
    $region46: #{tpu_custom_call.1} parent=1 // pred_check
      _
    $region47: #{tpu_custom_call.1} parent=1 // pred_check_branch
      %284 = sbr.rel (0) target = $region49
    $region48: #{tpu_custom_call.1} parent=1 // pred_region
      %s286 = ssub.s32 256, 256
      %287 = vsyncadd [#allocation5], %s286
      %s288 = sshll.u32 [#allocation11], 4
      %s289 = int_to_ptr.vmem [resolvable:$true] %s288
      %294 = dma.vmem_to_hbm [thread:$0]  %s289, 256, %s5, [#allocation5], 128, 128, 8
    $region49: #{tpu_custom_call.1} parent=1 // pred_fallthru
      _
    // Predicated region
    $region50: #{tpu_custom_call.1} parent=1 // pred_check
      _
    $region51: #{tpu_custom_call.1} parent=1 // pred_check_branch
      %296 = sbr.rel (0) target = $region53
    $region52: #{tpu_custom_call.1} parent=1 // pred_region
      %297 = dma.done [#allocation5], 256
    $region53: #{tpu_custom_call.1} parent=1 // pred_fallthru
      _
    %298 = vsyncpa [#allocation4], 1
    %299 = vsyncpa [#allocation7], 1
    %300 = vsyncpa [#allocation10], 1
    %301 = vsyncpa [#allocation5], 1

</llo_original>
